<compile_context>
chip_gen: v5e
topology: v5e:2x2
jax: 0.10.0
libtpu: 0.0.40
codegen_flags: <defaults>
</compile_context>

<pallas_src>
import functools

import jax
import jax.numpy as jnp
from jax.experimental import pallas as pl
from jax.experimental.pallas import tpu as pltpu

_LANE = 128     # TPU lane width: last tile dim should be a multiple of this
_SUBLANE = 8    # f32 sublane width: second-to-last tile dim multiple


def _round_up(n, m):
    return (n + m - 1) // m * m


def _mlp_kernel(x_ref, w1_ref, b1_ref, w2_ref, b2_ref, w3_ref, b3_ref, o_ref):
    """One batch tile of Linear->ReLU->Linear->ReLU->Linear, fully fused.

    Weights/biases have constant index_maps, so they are VMEM-resident across
    grid steps; only x / out tiles are streamed (pipelined by Pallas).
    Matmuls accumulate in f32 on the MXU; bias add + ReLU are cheap VPU filler.
    """
    x = x_ref[...]
    h1 = jnp.dot(x, w1_ref[...], preferred_element_type=jnp.float32) + b1_ref[...]
    h1 = jnp.maximum(h1, 0.0).astype(w2_ref.dtype)
    h2 = jnp.dot(h1, w2_ref[...], preferred_element_type=jnp.float32) + b2_ref[...]
    h2 = jnp.maximum(h2, 0.0).astype(w3_ref.dtype)
    out = jnp.dot(h2, w3_ref[...], preferred_element_type=jnp.float32) + b3_ref[...]
    o_ref[...] = out.astype(o_ref.dtype)


def _pad2d(a, rows, cols, dtype=None):
    out = jnp.zeros((rows, cols), dtype if dtype is not None else a.dtype)
    return out.at[: a.shape[0], : a.shape[1]].set(a.astype(out.dtype))


def _choose_batch_tile(batch, in_p, h_p, out_p, w_bytes, max_tile,
                       vmem_budget=40 * 1024 * 1024):
    """Largest multiple-of-8 batch tile whose footprint fits the VMEM budget.

    Budget is conservative (fits v7x's 64 MiB physical VMEM with headroom).
    """
    resident = (in_p * h_p + h_p * h_p + h_p * out_p) * w_bytes + (2 * h_p + out_p) * 4
    tb = min(_round_up(max(batch, 1), _SUBLANE), _round_up(max(max_tile, 1), _SUBLANE))
    while tb > _SUBLANE:
        streamed = 2 * tb * in_p * w_bytes      # double-buffered input tiles
        streamed += 2 * tb * out_p * 4          # double-buffered f32 output tiles
        streamed += 2 * tb * h_p * 4            # f32 intermediates h1 / h2
        if resident + streamed <= vmem_budget:
            break
        tb = _round_up(tb // 2, _SUBLANE)
    return max(tb, _SUBLANE)


@functools.partial(jax.jit, static_argnames=("compute_dtype", "max_batch_tile"))
def generator_wgangp_forward(x, params, *, compute_dtype=jnp.bfloat16,
                             max_batch_tile=512):
    """Fused MLP forward pass (same semantics as the PyTorch module).

    x: (B, input_size) float32
    params: w1 (In,H), b1 (1,H), w2 (H,H), b2 (1,H), w3 (H,Out), b3 (1,Out)
    returns: (B, output_size) float32
    """
    w1, b1 = params["w1"], params["b1"]
    w2, b2 = params["w2"], params["b2"]
    w3, b3 = params["w3"], params["b3"]

    batch, in_sz = x.shape
    hid = w1.shape[1]
    out_sz = w3.shape[1]

    cd = jnp.dtype(compute_dtype)
    wbytes = cd.itemsize

    # Lane-dense (128-multiple) padded feature dims.
    in_p = _round_up(in_sz, _LANE)
    h_p = _round_up(hid, _LANE)
    out_p = _round_up(out_sz, _LANE)

    tb = _choose_batch_tile(batch, in_p, h_p, out_p, wbytes, max_batch_tile)
    batch_p = _round_up(batch, tb)
    grid = (batch_p // tb,)

    # Zero-pad: padded hidden units have zero weight+bias -> ReLU(0)=0 -> no
    # contribution downstream, so valid outputs are exactly preserved.
    x_p = _pad2d(x, batch_p, in_p, cd)
    w1_p = _pad2d(w1, in_p, h_p, cd)
    w2_p = _pad2d(w2, h_p, h_p, cd)
    w3_p = _pad2d(w3, h_p, out_p, cd)
    b1_p = _pad2d(b1, 1, h_p, jnp.float32)
    b2_p = _pad2d(b2, 1, h_p, jnp.float32)
    b3_p = _pad2d(b3, 1, out_p, jnp.float32)

    # VMEM sizing with headroom, capped below the v7x 64 MiB physical ceiling.
    resident = (in_p * h_p + h_p * h_p + h_p * out_p) * wbytes + (2 * h_p + out_p) * 4
    streamed = 2 * tb * in_p * wbytes + 2 * tb * out_p * 4 + 2 * tb * h_p * 4
    vmem_limit = int(min(max(2 * (resident + streamed), 32 * 1024 * 1024),
                         56 * 1024 * 1024))

    flops = 2 * batch_p * (in_p * h_p + h_p * h_p + h_p * out_p)
    bytes_accessed = (x_p.size * wbytes
                      + (w1_p.size + w2_p.size + w3_p.size) * wbytes
                      + (b1_p.size + b2_p.size + b3_p.size) * 4
                      + batch_p * out_p * 4)

    def resident_spec(shape):
        return pl.BlockSpec(shape, lambda i: (0, 0))

    out_padded = pl.pallas_call(
        _mlp_kernel,
        out_shape=jax.ShapeDtypeStruct((batch_p, out_p), jnp.float32),
        grid=grid,
        in_specs=[
            pl.BlockSpec((tb, in_p), lambda i: (i, 0)),   # streamed x tile
            resident_spec((in_p, h_p)),                   # w1 (resident)
            resident_spec((1, h_p)),                      # b1
            resident_spec((h_p, h_p)),                    # w2
            resident_spec((1, h_p)),                      # b2
            resident_spec((h_p, out_p)),                  # w3
            resident_spec((1, out_p)),                    # b3
        ],
        out_specs=pl.BlockSpec((tb, out_p), lambda i: (i, 0)),
        compiler_params=pltpu.CompilerParams(
            dimension_semantics=("parallel",),            # megacore on v7x
            vmem_limit_bytes=vmem_limit,
        ),
        cost_estimate=pl.CostEstimate(
            flops=flops, transcendentals=0, bytes_accessed=bytes_accessed),
    )(x_p, w1_p, b1_p, w2_p, b2_p, w3_p, b3_p)

    return out_padded[:batch, :out_sz]


def init_params(key, input_size, hidden_size, output_size):
    """Deterministic synthetic init (PyTorch-Linear-like uniform fan_in bound)."""
    ks = jax.random.split(key, 6)

    def linear(kw, kb, fan_in, fan_out):
        bound = 1.0 / jnp.sqrt(fan_in)
        # stored as (in, out) so the kernel computes x @ W
        w = jax.random.uniform(kw, (fan_in, fan_out), jnp.float32, -bound, bound)
        b = jax.random.uniform(kb, (1, fan_out), jnp.float32, -bound, bound)
        return w, b

    w1, b1 = linear(ks[0], ks[1], input_size, hidden_size)
    w2, b2 = linear(ks[2], ks[3], hidden_size, hidden_size)
    w3, b3 = linear(ks[4], ks[5], hidden_size, output_size)
    return {"w1": w1, "b1": b1, "w2": w2, "b2": b2, "w3": w3, "b3": b3}


def _reference_forward(x, p, compute_dtype=jnp.bfloat16):
    """Mixed-precision reference mirroring the kernel's casts (bf16 in, f32 acc)."""
    cd = compute_dtype

    def lin(h, w, b):
        return jnp.dot(h.astype(cd), w.astype(cd),
                       preferred_element_type=jnp.float32) + b

    h1 = jnp.maximum(lin(x, p["w1"], p["b1"]), 0.0)
    h2 = jnp.maximum(lin(h1, p["w2"], p["b2"]), 0.0)
    return lin(h2, p["w3"], p["b3"])


if __name__ == "__main__":
    input_size, hidden_size, output_size = 16, 32, 8
    batch = 24  # small; max_batch_tile=8 exercises a 3-step pipelined batch grid

    key = jax.random.PRNGKey(0)
    k_data, k_params = jax.random.split(key)
    x = jax.random.normal(k_data, (batch, input_size), jnp.float32)
    params = init_params(k_params, input_size, hidden_size, output_size)

    out = generator_wgangp_forward(x, params, max_batch_tile=8)
    out = jax.block_until_ready(out)

    ref = _reference_forward(x, params)
    assert out.shape == (batch, output_size)
    assert jnp.allclose(out, ref, atol=2e-3, rtol=2e-3), "mismatch vs reference"

    print("KERNEL_OK")
</pallas_src>

<mosaic_0001>
module attributes {stable_mosaic.version = 11 : i64} {
  func.func @_mlp_kernel(%arg0: i32, %arg1: memref<8x128xbf16, #tpu.memory_space<vmem>>, %arg2: memref<128x128xbf16, #tpu.memory_space<vmem>>, %arg3: memref<1x128xf32, #tpu.memory_space<vmem>>, %arg4: memref<128x128xbf16, #tpu.memory_space<vmem>>, %arg5: memref<1x128xf32, #tpu.memory_space<vmem>>, %arg6: memref<128x128xbf16, #tpu.memory_space<vmem>>, %arg7: memref<1x128xf32, #tpu.memory_space<vmem>>, %arg8: memref<8x128xf32, #tpu.memory_space<vmem>>) attributes {dimension_semantics = [#tpu.dimension_semantics<parallel>], iteration_bounds = array<i64: 3>, scalar_prefetch = 0 : i64, scratch_operands = 0 : i64, tpu.core_type = #tpu.core_type<tc>, window_params = [{transform_indices = @transform_0, window_bounds = array<i64: 8, 128>}, {pipeline_mode = #tpu.pipeline_mode<synchronous>, transform_indices = @transform_1, window_bounds = array<i64: 128, 128>}, {pipeline_mode = #tpu.pipeline_mode<synchronous>, transform_indices = @transform_2, window_bounds = array<i64: 1, 128>}, {pipeline_mode = #tpu.pipeline_mode<synchronous>, transform_indices = @transform_3, window_bounds = array<i64: 128, 128>}, {pipeline_mode = #tpu.pipeline_mode<synchronous>, transform_indices = @transform_4, window_bounds = array<i64: 1, 128>}, {pipeline_mode = #tpu.pipeline_mode<synchronous>, transform_indices = @transform_5, window_bounds = array<i64: 128, 128>}, {pipeline_mode = #tpu.pipeline_mode<synchronous>, transform_indices = @transform_6, window_bounds = array<i64: 1, 128>}, {transform_indices = @transform_7, window_bounds = array<i64: 8, 128>}]} {
    %c0 = arith.constant 0 : index
    %c0_0 = arith.constant 0 : index
    %0 = vector.load %arg1[%c0, %c0_0] : memref<8x128xbf16, #tpu.memory_space<vmem>>, vector<8x128xbf16>
    %c0_1 = arith.constant 0 : index
    %c0_2 = arith.constant 0 : index
    %1 = vector.load %arg2[%c0_1, %c0_2] : memref<128x128xbf16, #tpu.memory_space<vmem>>, vector<128x128xbf16>
    %cst = arith.constant dense<0.000000e+00> : vector<8x128xf32>
    %2 = tpu.matmul %0, %1, %cst {dimension_numbers = #tpu.dot_dimension_numbers<[1], [0], [0], [1], [0, 0, 1, 1], [], []>} : vector<8x128xbf16>, vector<128x128xbf16>, vector<8x128xf32> -> vector<8x128xf32>
    %c0_3 = arith.constant 0 : index
    %c0_4 = arith.constant 0 : index
    %3 = vector.load %arg3[%c0_3, %c0_4] : memref<1x128xf32, #tpu.memory_space<vmem>>, vector<1x128xf32>
    %4 = vector.broadcast %3 : vector<1x128xf32> to vector<8x128xf32>
    %5 = arith.addf %2, %4 : vector<8x128xf32>
    %cst_5 = arith.constant 0.000000e+00 : f32
    %6 = vector.broadcast %cst_5 : f32 to vector<8x128xf32>
    %7 = arith.maximumf %5, %6 : vector<8x128xf32>
    %8 = arith.truncf %7 : vector<8x128xf32> to vector<8x128xbf16>
    %c0_6 = arith.constant 0 : index
    %c0_7 = arith.constant 0 : index
    %9 = vector.load %arg4[%c0_6, %c0_7] : memref<128x128xbf16, #tpu.memory_space<vmem>>, vector<128x128xbf16>
    %cst_8 = arith.constant dense<0.000000e+00> : vector<8x128xf32>
    %10 = tpu.matmul %8, %9, %cst_8 {dimension_numbers = #tpu.dot_dimension_numbers<[1], [0], [0], [1], [0, 0, 1, 1], [], []>} : vector<8x128xbf16>, vector<128x128xbf16>, vector<8x128xf32> -> vector<8x128xf32>
    %c0_9 = arith.constant 0 : index
    %c0_10 = arith.constant 0 : index
    %11 = vector.load %arg5[%c0_9, %c0_10] : memref<1x128xf32, #tpu.memory_space<vmem>>, vector<1x128xf32>
    %12 = vector.broadcast %11 : vector<1x128xf32> to vector<8x128xf32>
    %13 = arith.addf %10, %12 : vector<8x128xf32>
    %cst_11 = arith.constant 0.000000e+00 : f32
    %14 = vector.broadcast %cst_11 : f32 to vector<8x128xf32>
    %15 = arith.maximumf %13, %14 : vector<8x128xf32>
    %16 = arith.truncf %15 : vector<8x128xf32> to vector<8x128xbf16>
    %c0_12 = arith.constant 0 : index
    %c0_13 = arith.constant 0 : index
    %17 = vector.load %arg6[%c0_12, %c0_13] : memref<128x128xbf16, #tpu.memory_space<vmem>>, vector<128x128xbf16>
    %cst_14 = arith.constant dense<0.000000e+00> : vector<8x128xf32>
    %18 = tpu.matmul %16, %17, %cst_14 {dimension_numbers = #tpu.dot_dimension_numbers<[1], [0], [0], [1], [0, 0, 1, 1], [], []>} : vector<8x128xbf16>, vector<128x128xbf16>, vector<8x128xf32> -> vector<8x128xf32>
    %c0_15 = arith.constant 0 : index
    %c0_16 = arith.constant 0 : index
    %19 = vector.load %arg7[%c0_15, %c0_16] : memref<1x128xf32, #tpu.memory_space<vmem>>, vector<1x128xf32>
    %20 = vector.broadcast %19 : vector<1x128xf32> to vector<8x128xf32>
    %21 = arith.addf %18, %20 : vector<8x128xf32>
    %c0_17 = arith.constant 0 : index
    %c0_18 = arith.constant 0 : index
    %22 = vector.load %arg8[%c0_17, %c0_18] : memref<8x128xf32, #tpu.memory_space<vmem>>, vector<8x128xf32>
    tpu.vector_store %arg8[%c0_17, %c0_18], %21 {strides = array<i32>} : memref<8x128xf32, #tpu.memory_space<vmem>>, vector<8x128xf32>,
    return
  }
  func.func @transform_0(%arg0: i32) -> (i32, i32) {
    %c0_i32 = arith.constant 0 : i32
    %c0_i32_0 = arith.constant 0 : i32
    return %arg0, %c0_i32 : i32, i32
  }
  func.func @transform_1(%arg0: i32) -> (i32, i32) {
    %c0_i32 = arith.constant 0 : i32
    %c0_i32_0 = arith.constant 0 : i32
    %c0_i32_1 = arith.constant 0 : i32
    return %c0_i32, %c0_i32_0 : i32, i32
  }
  func.func @transform_2(%arg0: i32) -> (i32, i32) {
    %c0_i32 = arith.constant 0 : i32
    %c0_i32_0 = arith.constant 0 : i32
    %c0_i32_1 = arith.constant 0 : i32
    return %c0_i32, %c0_i32_0 : i32, i32
  }
  func.func @transform_3(%arg0: i32) -> (i32, i32) {
    %c0_i32 = arith.constant 0 : i32
    %c0_i32_0 = arith.constant 0 : i32
    %c0_i32_1 = arith.constant 0 : i32
    return %c0_i32, %c0_i32_0 : i32, i32
  }
  func.func @transform_4(%arg0: i32) -> (i32, i32) {
    %c0_i32 = arith.constant 0 : i32
    %c0_i32_0 = arith.constant 0 : i32
    %c0_i32_1 = arith.constant 0 : i32
    return %c0_i32, %c0_i32_0 : i32, i32
  }
  func.func @transform_5(%arg0: i32) -> (i32, i32) {
    %c0_i32 = arith.constant 0 : i32
    %c0_i32_0 = arith.constant 0 : i32
    %c0_i32_1 = arith.constant 0 : i32
    return %c0_i32, %c0_i32_0 : i32, i32
  }
  func.func @transform_6(%arg0: i32) -> (i32, i32) {
    %c0_i32 = arith.constant 0 : i32
    %c0_i32_0 = arith.constant 0 : i32
    %c0_i32_1 = arith.constant 0 : i32
    return %c0_i32, %c0_i32_0 : i32, i32
  }
  func.func @transform_7(%arg0: i32) -> (i32, i32) {
    %c0_i32 = arith.constant 0 : i32
    %c0_i32_0 = arith.constant 0 : i32
    return %arg0, %c0_i32 : i32, i32
  }
}

</mosaic_0001>

<llo_original>
// kernel: generator_wgangp_forward.1
$region0: #{generator_wgangp_forward.1}
  #allocation0 [shape = 'u32[]', space=smem, size = 0x4, offset = 0x4, fixed_abs, tag = 'smem constant byte address 0x4 - core index']
  #allocation1 [shape = 'u32[72,128]{1,0:T(1,128)}', space=vmem, size = 0x9000, scoped, tag = 'internal scratch']
  %s0 = inlined_call_operand.vmem [shape: bf16[24,128], index: 0, kind: input, shape index: {}]
  %s1 = inlined_call_operand.vmem [shape: bf16[128,128], index: 1, kind: input, shape index: {}]
  %s2 = inlined_call_operand.vmem [shape: f32[1,128], index: 2, kind: input, shape index: {}]
  %s3 = inlined_call_operand.vmem [shape: bf16[128,128], index: 3, kind: input, shape index: {}]
  %s4 = inlined_call_operand.vmem [shape: f32[1,128], index: 4, kind: input, shape index: {}]
  %s5 = inlined_call_operand.vmem [shape: bf16[128,128], index: 5, kind: input, shape index: {}]
  %s6 = inlined_call_operand.vmem [shape: f32[1,128], index: 6, kind: input, shape index: {}]
  %s7 = inlined_call_operand.vmem [shape: f32[24,128], index: 7, kind: output, shape index: {}]
  %s8 = sld [smem:[#allocation0]]
  $region61: #{generator_wgangp_forward.1} parent=0
    _
  %s10 = ssub.s32 1, %s8
  %s11 = scalar_select 0, %s10, %s8
  loop: start=0, step=1, limit=5
  $region2: #{generator_wgangp_forward.1} parent=0 // loop_pre_header
    _
  $region3: #{generator_wgangp_forward.1} parent=0 // loop_header
    %s13 = sphi 0, %s17
    %p14 = scmp.ge.s32.totalorder %s13, 5
    %s23 = sphi 0, %s25
    %s26 = sphi 0, %s23
    %s27 = sphi 0, %s26
    %s43 = sphi 0, %s27
    %s47 = sphi 0, %s47
    %s49 = sphi 0, %s47
    %s50 = sphi 0, %s49
    %s64 = sphi 0, %s50
    %s68 = sphi 0, %s68
    %s70 = sphi 0, %s68
    %s71 = sphi 0, %s70
    %s85 = sphi 0, %s71
    %s89 = sphi 0, %s89
    %s91 = sphi 0, %s89
    %s92 = sphi 0, %s91
    %s106 = sphi 0, %s92
    %s110 = sphi 0, %s110
    %s112 = sphi 0, %s110
    %s113 = sphi 0, %s112
    %s127 = sphi 0, %s113
    %s131 = sphi 0, %s131
    %s133 = sphi 0, %s131
    %s134 = sphi 0, %s133
    %s148 = sphi 0, %s134
    %s152 = sphi 0, %s152
    %s154 = sphi 0, %s152
    %s155 = sphi 0, %s154
    %s169 = sphi 0, %s155
    %s175 = sphi 0, %s177
    %s178 = sphi 0, %s175
    %s179 = sphi 0, %s178
    %s195 = sphi 0, %s179
  $region4: #{generator_wgangp_forward.1} parent=0 // loop_header_branch
    %16 = sbr.rel (%p14) target = $region8
  $region5: #{generator_wgangp_forward.1} parent=0 // loop_body
    %s18 = ssub.s32 %s13, 1
    %s19 = ssub.s32 %s13, 2
    %s20 = sadd.s32 %s13, 1
    %s21 = ssub.s32 %s13, %s20
    %p22 = scmp.eq.s32.totalorder %s21, 0
    %s24 = sadd.s32 %s23, 1
    %s25 = scalar_select %p22, %s23, %s24
    %p28 = pneg %p22
    %p29 = scmp.eq.s32.totalorder %s13, 2
    %p30 = por %p28, %p29
    %p31 = scmp.ne.s32.totalorder %s23, %s26
    %p32 = scmp.eq.s32.totalorder %s13, 0
    %p33 = por %p31, %p32
    %p34 = scmp.ne.s32.totalorder %s23, %s26
    %p35 = scmp.eq.s32.totalorder %s18, 2
    %p36 = por %p34, %p35
    %p37 = scmp.ne.s32.totalorder %s26, %s27
    %p38 = scmp.eq.s32.totalorder %s18, 0
    %p39 = por %p37, %p38
    %p40 = scmp.ne.s32.totalorder %s26, %s27
    %p41 = scmp.eq.s32.totalorder %s19, 2
    %p42 = por %p40, %p41
    %p44 = scmp.ne.s32.totalorder %s27, %s43
    %p45 = scmp.eq.s32.totalorder %s19, 0
    %p46 = por %p44, %p45
    %s48 = sadd.s32 %s47, 1
    %p51 = scmp.eq.s32.totalorder %s13, 2
    %p52 = scmp.ne.s32.totalorder %s47, %s49
    %p53 = scmp.eq.s32.totalorder %s13, 0
    %p54 = por %p52, %p53
    %p55 = scmp.ne.s32.totalorder %s47, %s49
    %p56 = scmp.eq.s32.totalorder %s18, 2
    %p57 = por %p55, %p56
    %p58 = scmp.ne.s32.totalorder %s49, %s50
    %p59 = scmp.eq.s32.totalorder %s18, 0
    %p60 = por %p58, %p59
    %p61 = scmp.ne.s32.totalorder %s49, %s50
    %p62 = scmp.eq.s32.totalorder %s19, 2
    %p63 = por %p61, %p62
    %p65 = scmp.ne.s32.totalorder %s50, %s64
    %p66 = scmp.eq.s32.totalorder %s19, 0
    %p67 = por %p65, %p66
    %s69 = sadd.s32 %s68, 1
    %p72 = scmp.eq.s32.totalorder %s13, 2
    %p73 = scmp.ne.s32.totalorder %s68, %s70
    %p74 = scmp.eq.s32.totalorder %s13, 0
    %p75 = por %p73, %p74
    %p76 = scmp.ne.s32.totalorder %s68, %s70
    %p77 = scmp.eq.s32.totalorder %s18, 2
    %p78 = por %p76, %p77
    %p79 = scmp.ne.s32.totalorder %s70, %s71
    %p80 = scmp.eq.s32.totalorder %s18, 0
    %p81 = por %p79, %p80
    %p82 = scmp.ne.s32.totalorder %s70, %s71
    %p83 = scmp.eq.s32.totalorder %s19, 2
    %p84 = por %p82, %p83
    %p86 = scmp.ne.s32.totalorder %s71, %s85
    %p87 = scmp.eq.s32.totalorder %s19, 0
    %p88 = por %p86, %p87
    %s90 = sadd.s32 %s89, 1
    %p93 = scmp.eq.s32.totalorder %s13, 2
    %p94 = scmp.ne.s32.totalorder %s89, %s91
    %p95 = scmp.eq.s32.totalorder %s13, 0
    %p96 = por %p94, %p95
    %p97 = scmp.ne.s32.totalorder %s89, %s91
    %p98 = scmp.eq.s32.totalorder %s18, 2
    %p99 = por %p97, %p98
    %p100 = scmp.ne.s32.totalorder %s91, %s92
    %p101 = scmp.eq.s32.totalorder %s18, 0
    %p102 = por %p100, %p101
    %p103 = scmp.ne.s32.totalorder %s91, %s92
    %p104 = scmp.eq.s32.totalorder %s19, 2
    %p105 = por %p103, %p104
    %p107 = scmp.ne.s32.totalorder %s92, %s106
    %p108 = scmp.eq.s32.totalorder %s19, 0
    %p109 = por %p107, %p108
    %s111 = sadd.s32 %s110, 1
    %p114 = scmp.eq.s32.totalorder %s13, 2
    %p115 = scmp.ne.s32.totalorder %s110, %s112
    %p116 = scmp.eq.s32.totalorder %s13, 0
    %p117 = por %p115, %p116
    %p118 = scmp.ne.s32.totalorder %s110, %s112
    %p119 = scmp.eq.s32.totalorder %s18, 2
    %p120 = por %p118, %p119
    %p121 = scmp.ne.s32.totalorder %s112, %s113
    %p122 = scmp.eq.s32.totalorder %s18, 0
    %p123 = por %p121, %p122
    %p124 = scmp.ne.s32.totalorder %s112, %s113
    %p125 = scmp.eq.s32.totalorder %s19, 2
    %p126 = por %p124, %p125
    %p128 = scmp.ne.s32.totalorder %s113, %s127
    %p129 = scmp.eq.s32.totalorder %s19, 0
    %p130 = por %p128, %p129
    %s132 = sadd.s32 %s131, 1
    %p135 = scmp.eq.s32.totalorder %s13, 2
    %p136 = scmp.ne.s32.totalorder %s131, %s133
    %p137 = scmp.eq.s32.totalorder %s13, 0
    %p138 = por %p136, %p137
    %p139 = scmp.ne.s32.totalorder %s131, %s133
    %p140 = scmp.eq.s32.totalorder %s18, 2
    %p141 = por %p139, %p140
    %p142 = scmp.ne.s32.totalorder %s133, %s134
    %p143 = scmp.eq.s32.totalorder %s18, 0
    %p144 = por %p142, %p143
    %p145 = scmp.ne.s32.totalorder %s133, %s134
    %p146 = scmp.eq.s32.totalorder %s19, 2
    %p147 = por %p145, %p146
    %p149 = scmp.ne.s32.totalorder %s134, %s148
    %p150 = scmp.eq.s32.totalorder %s19, 0
    %p151 = por %p149, %p150
    %s153 = sadd.s32 %s152, 1
    %p156 = scmp.eq.s32.totalorder %s13, 2
    %p157 = scmp.ne.s32.totalorder %s152, %s154
    %p158 = scmp.eq.s32.totalorder %s13, 0
    %p159 = por %p157, %p158
    %p160 = scmp.ne.s32.totalorder %s152, %s154
    %p161 = scmp.eq.s32.totalorder %s18, 2
    %p162 = por %p160, %p161
    %p163 = scmp.ne.s32.totalorder %s154, %s155
    %p164 = scmp.eq.s32.totalorder %s18, 0
    %p165 = por %p163, %p164
    %p166 = scmp.ne.s32.totalorder %s154, %s155
    %p167 = scmp.eq.s32.totalorder %s19, 2
    %p168 = por %p166, %p167
    %p170 = scmp.ne.s32.totalorder %s155, %s169
    %p171 = scmp.eq.s32.totalorder %s19, 0
    %p172 = por %p170, %p171
    %s173 = ssub.s32 %s13, %s20
    %p174 = scmp.eq.s32.totalorder %s173, 0
    %s176 = sadd.s32 %s175, 1
    %s177 = scalar_select %p174, %s175, %s176
    %p180 = pneg %p174
    %p181 = scmp.eq.s32.totalorder %s13, 2
    %p182 = por %p180, %p181
    %p183 = scmp.ne.s32.totalorder %s175, %s178
    %p184 = scmp.eq.s32.totalorder %s13, 0
    %p185 = por %p183, %p184
    %p186 = scmp.ne.s32.totalorder %s175, %s178
    %p187 = scmp.eq.s32.totalorder %s18, 2
    %p188 = por %p186, %p187
    %p189 = scmp.ne.s32.totalorder %s178, %s179
    %p190 = scmp.eq.s32.totalorder %s18, 0
    %p191 = por %p189, %p190
    %p192 = scmp.ne.s32.totalorder %s178, %s179
    %p193 = scmp.eq.s32.totalorder %s19, 2
    %p194 = por %p192, %p193
    %p196 = scmp.ne.s32.totalorder %s179, %s195
    %p197 = scmp.eq.s32.totalorder %s19, 0
    %p198 = por %p196, %p197
    %p199 = scmp.le.s32.totalorder 1, %s13
    %p200 = scmp.lt.s32.totalorder %s13, 4
    %p201 = pnand %p199, %p200
    %p202 = pneg %p201
    // Predicated region
    $region9: #{generator_wgangp_forward.1} parent=5 // pred_check
      _
    $region10: #{generator_wgangp_forward.1} parent=5 // pred_check_branch
      %204 = sbr.rel (%p201) target = $region12
    $region11: #{generator_wgangp_forward.1} parent=5 // pred_region
      %s205 = ssub.s32 %s13, 1
      // Predicated region
      $region13: #{generator_wgangp_forward.1} parent=11 // pred_check
        %p206 = pneg %p60
      $region14: #{generator_wgangp_forward.1} parent=11 // pred_check_branch
        %208 = sbr.rel (%p206) target = $region16
      $region15: #{generator_wgangp_forward.1} parent=11 // pred_region
        _
      $region16: #{generator_wgangp_forward.1} parent=11 // pred_fallthru
        _
      // Predicated region
      $region17: #{generator_wgangp_forward.1} parent=11 // pred_check
        %p209 = pneg %p81
      $region18: #{generator_wgangp_forward.1} parent=11 // pred_check_branch
        %211 = sbr.rel (%p209) target = $region20
      $region19: #{generator_wgangp_forward.1} parent=11 // pred_region
        _
      $region20: #{generator_wgangp_forward.1} parent=11 // pred_fallthru
        _
      // Predicated region
      $region21: #{generator_wgangp_forward.1} parent=11 // pred_check
        %p212 = pneg %p102
      $region22: #{generator_wgangp_forward.1} parent=11 // pred_check_branch
        %214 = sbr.rel (%p212) target = $region24
      $region23: #{generator_wgangp_forward.1} parent=11 // pred_region
        _
      $region24: #{generator_wgangp_forward.1} parent=11 // pred_fallthru
        _
      // Predicated region
      $region25: #{generator_wgangp_forward.1} parent=11 // pred_check
        %p215 = pneg %p123
      $region26: #{generator_wgangp_forward.1} parent=11 // pred_check_branch
        %217 = sbr.rel (%p215) target = $region28
      $region27: #{generator_wgangp_forward.1} parent=11 // pred_region
        _
      $region28: #{generator_wgangp_forward.1} parent=11 // pred_fallthru
        _
      // Predicated region
      $region29: #{generator_wgangp_forward.1} parent=11 // pred_check
        %p218 = pneg %p144
      $region30: #{generator_wgangp_forward.1} parent=11 // pred_check_branch
        %220 = sbr.rel (%p218) target = $region32
      $region31: #{generator_wgangp_forward.1} parent=11 // pred_region
        _
      $region32: #{generator_wgangp_forward.1} parent=11 // pred_fallthru
        _
      // Predicated region
      $region33: #{generator_wgangp_forward.1} parent=11 // pred_check
        %p221 = pneg %p165
      $region34: #{generator_wgangp_forward.1} parent=11 // pred_check_branch
        %223 = sbr.rel (%p221) target = $region36
      $region35: #{generator_wgangp_forward.1} parent=11 // pred_region
        _
      $region36: #{generator_wgangp_forward.1} parent=11 // pred_fallthru
        _
    $region12: #{generator_wgangp_forward.1} parent=5 // pred_fallthru
      _
    %p224 = scmp.lt.s32.totalorder %s13, 3
    // Predicated region
    $region37: #{generator_wgangp_forward.1} parent=5 // pred_check
      %p225 = pneg %p224
    $region38: #{generator_wgangp_forward.1} parent=5 // pred_check_branch
      %227 = sbr.rel (%p225) target = $region40
    $region39: #{generator_wgangp_forward.1} parent=5 // pred_region
      // Predicated region
      $region41: #{generator_wgangp_forward.1} parent=39 // pred_check
        %p228 = pneg %p33
      $region42: #{generator_wgangp_forward.1} parent=39 // pred_check_branch
        %230 = sbr.rel (%p228) target = $region44
      $region43: #{generator_wgangp_forward.1} parent=39 // pred_region
        %p231 = scmp.lt.s32.totalorder %s13, 2
        %s232 = scalar_select %p231, %s13, 2
        %s233 = smul.addr %s232, 4
        %s234 = scalar_lea.vmem %s0, %s233
      $region44: #{generator_wgangp_forward.1} parent=39 // pred_fallthru
        _
    $region40: #{generator_wgangp_forward.1} parent=5 // pred_fallthru
      _
    %p235 = scmp.le.s32.totalorder 1, %s13
    %p236 = scmp.lt.s32.totalorder %s13, 4
    %p237 = pnand %p235, %p236
    %p238 = pneg %p237
    // Predicated region
    $region45: #{generator_wgangp_forward.1} parent=5 // pred_check
      _
    $region46: #{generator_wgangp_forward.1} parent=5 // pred_check_branch
      %240 = sbr.rel (%p237) target = $region48
    $region47: #{generator_wgangp_forward.1} parent=5 // pred_region
      %s241 = ssub.s32 %s13, 1
      %p242 = scmp.lt.s32.totalorder %s18, 2
      %s243 = scalar_select %p242, %s18, 2
      %s244 = smul.addr %s243, 4
      %s245 = scalar_lea.vmem %s0, %s244
      %p246 = pneg %p39
      %p247 = pneg %p36
      %p248 = pneg %p60
      %p249 = pneg %p57
      %p250 = pneg %p81
      %p251 = pneg %p78
      %p252 = pneg %p102
      %p253 = pneg %p99
      %p254 = pneg %p123
      %p255 = pneg %p120
      %p256 = pneg %p144
      %p257 = pneg %p141
      %p258 = pneg %p165
      %p259 = pneg %p162
      %p260 = pneg %p191
      %p261 = pneg %p188
      %p262 = scmp.lt.s32.totalorder %s18, 2
      %s263 = scalar_select %p262, %s18, 2
      %s264 = smul.addr %s263, 8
      %s265 = scalar_lea.vmem %s7, %s264
      %p266 = scmp.lt.s32.totalorder %s18, 2
      %s267 = scalar_select %p266, %s18, 2
      %s268 = smul.addr %s267, 4
      %s269 = scalar_lea.vmem %s0, %s268
      %p270 = scmp.lt.s32.totalorder %s18, 2
      %s271 = scalar_select %p270, %s18, 2
      %s272 = smul.addr %s271, 8
      %s273 = scalar_lea.vmem %s7, %s272
      %v274 = vld [vmem:[%s269] sm:$0xf]
      %v275 = vld [vmem:[%s1] sm:$0xf]
      %v276 = vld [vmem:[%s1 + $0x4] sm:$0xf]
      %v277 = vld [vmem:[%s1 + $0x8] sm:$0xf]
      %v278 = vld [vmem:[%s1 + $0xc] sm:$0xf]
      %v279 = vld [vmem:[%s1 + $0x10] sm:$0xf]
      %v280 = vld [vmem:[%s1 + $0x14] sm:$0xf]
      %v281 = vld [vmem:[%s1 + $0x18] sm:$0xf]
      %v282 = vld [vmem:[%s1 + $0x1c] sm:$0xf]
      %v283 = vld [vmem:[%s1 + $0x20] sm:$0xf]
      %v284 = vld [vmem:[%s1 + $0x24] sm:$0xf]
      %v285 = vld [vmem:[%s1 + $0x28] sm:$0xf]
      %v286 = vld [vmem:[%s1 + $0x2c] sm:$0xf]
      %v287 = vld [vmem:[%s1 + $0x30] sm:$0xf]
      %v288 = vld [vmem:[%s1 + $0x34] sm:$0xf]
      %v289 = vld [vmem:[%s1 + $0x38] sm:$0xf]
      %v290 = vld [vmem:[%s1 + $0x3c] sm:$0xf]
      %v291 = vld [vmem:[%s2] sm:$0x1]
      %v293 = vperm.slane %v291, 0
      %v311 = vunpack.c.l.b16 %v275
      %v312 = vunpack.c.l.b16 %v276
      %v313 = vunpack.c.l.b16 %v277
      %v314 = vunpack.c.l.b16 %v278
      %v315 = vunpack.c.l.b16 %v279
      %v316 = vunpack.c.l.b16 %v280
      %v317 = vunpack.c.l.b16 %v281
      %v318 = vunpack.c.l.b16 %v282
      %v319 = vunpack.c.l.b16 %v283
      %v320 = vunpack.c.l.b16 %v284
      %v321 = vunpack.c.l.b16 %v285
      %v322 = vunpack.c.l.b16 %v286
      %v323 = vunpack.c.l.b16 %v287
      %v324 = vunpack.c.l.b16 %v288
      %v325 = vunpack.c.l.b16 %v289
      %v326 = vunpack.c.l.b16 %v290
      %v327 = vpack.c.b16 %v312, %v311
      %v328 = vpack.c.b16 %v314, %v313
      %v329 = vpack.c.b16 %v316, %v315
      %v330 = vpack.c.b16 %v318, %v317
      %v331 = vpack.c.b16 %v320, %v319
      %v332 = vpack.c.b16 %v322, %v321
      %v333 = vpack.c.b16 %v324, %v323
      %v334 = vpack.c.b16 %v326, %v325
      %343 = vmatpush.bf16.msra.mxu0 %v334
      %344 = vmatpush.bf16.msra.mxu0 %v333
      %345 = vmatpush.bf16.msra.mxu0 %v332
      %346 = vmatpush.bf16.msra.mxu0 %v331
      %347 = vmatpush.bf16.msra.mxu0 %v330
      %348 = vmatpush.bf16.msra.mxu0 %v329
      %349 = vmatpush.bf16.msra.mxu0 %v328
      %350 = vmatpush.bf16.msra.mxu0 %v327
      %351 = vmatmul.bf16.gmra.mxu0 %v274
      %v352 = vpop.f32.mrf.mxu0
      %v353 = vadd.f32 %v293, %v352
      %v354 = vpop.f32.mrf.mxu0
      %355 = vdwg.mxu0
      %v356 = vmax.f32 %v353, 0.0
      %v357 = vpack.c.bf16 %v356, %v356
      %v358 = vld [vmem:[%s3] sm:$0xf]
      %v359 = vld [vmem:[%s3 + $0x4] sm:$0xf]
      %v360 = vld [vmem:[%s3 + $0x8] sm:$0xf]
      %v361 = vld [vmem:[%s3 + $0xc] sm:$0xf]
      %v362 = vld [vmem:[%s3 + $0x10] sm:$0xf]
      %v363 = vld [vmem:[%s3 + $0x14] sm:$0xf]
      %v364 = vld [vmem:[%s3 + $0x18] sm:$0xf]
      %v365 = vld [vmem:[%s3 + $0x1c] sm:$0xf]
      %v366 = vld [vmem:[%s3 + $0x20] sm:$0xf]
      %v367 = vld [vmem:[%s3 + $0x24] sm:$0xf]
      %v368 = vld [vmem:[%s3 + $0x28] sm:$0xf]
      %v369 = vld [vmem:[%s3 + $0x2c] sm:$0xf]
      %v370 = vld [vmem:[%s3 + $0x30] sm:$0xf]
      %v371 = vld [vmem:[%s3 + $0x34] sm:$0xf]
      %v372 = vld [vmem:[%s3 + $0x38] sm:$0xf]
      %v373 = vld [vmem:[%s3 + $0x3c] sm:$0xf]
      %v374 = vld [vmem:[%s4] sm:$0x1]
      %v376 = vperm.slane %v374, 0
      %v394 = vunpack.c.l.b16 %v358
      %v395 = vunpack.c.l.b16 %v359
      %v396 = vunpack.c.l.b16 %v360
      %v397 = vunpack.c.l.b16 %v361
      %v398 = vunpack.c.l.b16 %v362
      %v399 = vunpack.c.l.b16 %v363
      %v400 = vunpack.c.l.b16 %v364
      %v401 = vunpack.c.l.b16 %v365
      %v402 = vunpack.c.l.b16 %v366
      %v403 = vunpack.c.l.b16 %v367
      %v404 = vunpack.c.l.b16 %v368
      %v405 = vunpack.c.l.b16 %v369
      %v406 = vunpack.c.l.b16 %v370
      %v407 = vunpack.c.l.b16 %v371
      %v408 = vunpack.c.l.b16 %v372
      %v409 = vunpack.c.l.b16 %v373
      %v410 = vpack.c.b16 %v395, %v394
      %v411 = vpack.c.b16 %v397, %v396
      %v412 = vpack.c.b16 %v399, %v398
      %v413 = vpack.c.b16 %v401, %v400
      %v414 = vpack.c.b16 %v403, %v402
      %v415 = vpack.c.b16 %v405, %v404
      %v416 = vpack.c.b16 %v407, %v406
      %v417 = vpack.c.b16 %v409, %v408
      %426 = vmatpush.bf16.msra.mxu0 %v417
      %427 = vmatpush.bf16.msra.mxu0 %v416
      %428 = vmatpush.bf16.msra.mxu0 %v415
      %429 = vmatpush.bf16.msra.mxu0 %v414
      %430 = vmatpush.bf16.msra.mxu0 %v413
      %431 = vmatpush.bf16.msra.mxu0 %v412
      %432 = vmatpush.bf16.msra.mxu0 %v411
      %433 = vmatpush.bf16.msra.mxu0 %v410
      %434 = vmatmul.bf16.gmra.mxu0 %v357
      %v435 = vpop.f32.mrf.mxu0
      %v436 = vadd.f32 %v376, %v435
      %v437 = vpop.f32.mrf.mxu0
      %438 = vdwg.mxu0
      %v439 = vmax.f32 %v436, 0.0
      %v440 = vpack.c.bf16 %v439, %v439
      %v441 = vld [vmem:[%s5] sm:$0xf]
      %v442 = vld [vmem:[%s5 + $0x4] sm:$0xf]
      %v443 = vld [vmem:[%s5 + $0x8] sm:$0xf]
      %v444 = vld [vmem:[%s5 + $0xc] sm:$0xf]
      %v445 = vld [vmem:[%s5 + $0x10] sm:$0xf]
      %v446 = vld [vmem:[%s5 + $0x14] sm:$0xf]
      %v447 = vld [vmem:[%s5 + $0x18] sm:$0xf]
      %v448 = vld [vmem:[%s5 + $0x1c] sm:$0xf]
      %v449 = vld [vmem:[%s5 + $0x20] sm:$0xf]
      %v450 = vld [vmem:[%s5 + $0x24] sm:$0xf]
      %v451 = vld [vmem:[%s5 + $0x28] sm:$0xf]
      %v452 = vld [vmem:[%s5 + $0x2c] sm:$0xf]
      %v453 = vld [vmem:[%s5 + $0x30] sm:$0xf]
      %v454 = vld [vmem:[%s5 + $0x34] sm:$0xf]
      %v455 = vld [vmem:[%s5 + $0x38] sm:$0xf]
      %v456 = vld [vmem:[%s5 + $0x3c] sm:$0xf]
      %v457 = vld [vmem:[%s6] sm:$0x1]
      %v459 = vperm.slane %v457, 0
      %v477 = vunpack.c.l.b16 %v441
      %v478 = vunpack.c.l.b16 %v442
      %v479 = vunpack.c.l.b16 %v443
      %v480 = vunpack.c.l.b16 %v444
      %v481 = vunpack.c.l.b16 %v445
      %v482 = vunpack.c.l.b16 %v446
      %v483 = vunpack.c.l.b16 %v447
      %v484 = vunpack.c.l.b16 %v448
      %v485 = vunpack.c.l.b16 %v449
      %v486 = vunpack.c.l.b16 %v450
      %v487 = vunpack.c.l.b16 %v451
      %v488 = vunpack.c.l.b16 %v452
      %v489 = vunpack.c.l.b16 %v453
      %v490 = vunpack.c.l.b16 %v454
      %v491 = vunpack.c.l.b16 %v455
      %v492 = vunpack.c.l.b16 %v456
      %v493 = vpack.c.b16 %v478, %v477
      %v494 = vpack.c.b16 %v480, %v479
      %v495 = vpack.c.b16 %v482, %v481
      %v496 = vpack.c.b16 %v484, %v483
      %v497 = vpack.c.b16 %v486, %v485
      %v498 = vpack.c.b16 %v488, %v487
      %v499 = vpack.c.b16 %v490, %v489
      %v500 = vpack.c.b16 %v492, %v491
      %509 = vmatpush.bf16.msra.mxu0 %v500
      %510 = vmatpush.bf16.msra.mxu0 %v499
      %511 = vmatpush.bf16.msra.mxu0 %v498
      %512 = vmatpush.bf16.msra.mxu0 %v497
      %513 = vmatpush.bf16.msra.mxu0 %v496
      %514 = vmatpush.bf16.msra.mxu0 %v495
      %515 = vmatpush.bf16.msra.mxu0 %v494
      %516 = vmatpush.bf16.msra.mxu0 %v493
      %517 = vmatmul.bf16.gmra.mxu0 %v440
      %v518 = vpop.f32.mrf.mxu0
      %v519 = vadd.f32 %v459, %v518
      %v520 = vpop.f32.mrf.mxu0
      %521 = vdwg.mxu0
      %522 = vst [vmem:[%s273] sm:$0xff] %v519
      %p523 = scmp.lt.s32.totalorder %s18, 2
      %s524 = scalar_select %p523, %s18, 2
      %s525 = smul.addr %s524, 8
      %s526 = scalar_lea.vmem %s7, %s525
      // Predicated region
      $region49: #{generator_wgangp_forward.1} parent=47 // pred_check
        %p527 = pneg %p188
      $region50: #{generator_wgangp_forward.1} parent=47 // pred_check_branch
        %529 = sbr.rel (%p527) target = $region52
      $region51: #{generator_wgangp_forward.1} parent=47 // pred_region
        _
      $region52: #{generator_wgangp_forward.1} parent=47 // pred_fallthru
        _
    $region48: #{generator_wgangp_forward.1} parent=5 // pred_fallthru
      _
    %p530 = scmp.le.s32.totalorder 2, %s13
    // Predicated region
    $region53: #{generator_wgangp_forward.1} parent=5 // pred_check
      %p531 = pneg %p530
    $region54: #{generator_wgangp_forward.1} parent=5 // pred_check_branch
      %533 = sbr.rel (%p531) target = $region56
    $region55: #{generator_wgangp_forward.1} parent=5 // pred_region
      %s534 = ssub.s32 %s13, 2
      // Predicated region
      $region57: #{generator_wgangp_forward.1} parent=55 // pred_check
        %p535 = pneg %p194
      $region58: #{generator_wgangp_forward.1} parent=55 // pred_check_branch
        %537 = sbr.rel (%p535) target = $region60
      $region59: #{generator_wgangp_forward.1} parent=55 // pred_region
        %p538 = scmp.lt.s32.totalorder %s19, 2
        %s539 = scalar_select %p538, %s19, 2
        %s540 = smul.addr %s539, 8
        %s541 = scalar_lea.vmem %s7, %s540
      $region60: #{generator_wgangp_forward.1} parent=55 // pred_fallthru
        _
    $region56: #{generator_wgangp_forward.1} parent=5 // pred_fallthru
      _
  $region6: #{generator_wgangp_forward.1} parent=0 // loop_footer
    %s17 = sadd.s32 1, %s13
  $region7: #{generator_wgangp_forward.1} parent=0 // loop_footer_branch
    %12 = sbr.rel target = $region3
  $region8: #{generator_wgangp_forward.1} parent=0 // loop_exit
    _

</llo_original>
